<compile_context>
chip_gen: v6e
topology: v6e:2x2x1
jax: 0.10.0
libtpu: 0.0.40
codegen_flags: <defaults>
</compile_context>

<pallas_src>
from functools import partial

import jax
import jax.numpy as jnp
from jax import lax
from jax.experimental import pallas as pl
from jax.experimental.pallas import tpu as pltpu


def _round_up(x, m):
    return ((x + m - 1) // m) * m


def _cluster_kernel(xf_ref, gum_ref, o_ref, *, C, inv_two_sigma_sq, threshold):
    xf_all = xf_ref[...]            # [Bblk, Cp, Fp] f32; rows >= C are zero padding
    g = gum_ref[...]                # [Bblk, C,  Cp] Gumbel(0,1) noise (cols >= C unused)
    xf_row = xf_all[:, :C, :]       # [Bblk, C,  Fp] the real channels (tile-aligned slice)
    Cp = xf_all.shape[1]

    # ---- pairwise Gram on the MXU: gram[b,i,j] = <xf_i, xf_j> ----
    # bf16 operands, f32 accumulation; the cancellation-prone combination is clamped below.
    gram = jnp.einsum(
        "bcf,bdf->bcd",
        xf_row.astype(jnp.bfloat16), xf_all.astype(jnp.bfloat16),
        preferred_element_type=jnp.float32)                       # [Bblk, C, Cp]

    # squared norms computed directly (cheaper than diag-masking the Gram)
    sq_i = jnp.sum(xf_row * xf_row, axis=-1, keepdims=True)       # [Bblk, C, 1]
    sq_j = jnp.sum(xf_all * xf_all, axis=-1)[:, None, :]          # [Bblk, 1, Cp]

    eucl = jnp.maximum(sq_i + sq_j - 2.0 * gram, 0.0)             # [Bblk, C, Cp]
    dist = 1.0 - jnp.exp(-eucl * inv_two_sigma_sq)                # RBF distance

    # masks: zero the diagonal and the padded (j >= C) columns
    row = lax.broadcasted_iota(jnp.int32, (C, Cp), 0)
    col = lax.broadcasted_iota(jnp.int32, (C, Cp), 1)
    diag = row == col
    off_valid = ((col < C) & jnp.logical_not(diag)).astype(jnp.float32)
    diag_f = diag.astype(jnp.float32)

    # exp_dist = mask / (dist + 1e-10); the f32 divide lowers onto the EUP reciprocal.
    # TODO(synk): pl.reciprocal(dist + 1e-10, approx=True) would skip the Newton step;
    # kept as a plain divide for closer numeric parity with the torch module.
    exp_dist = off_valid / (dist + 1e-10)
    exp_max = jnp.max(exp_dist, axis=-1, keepdims=True)           # row max over valid cols
    p = (exp_dist / exp_max + diag_f) * 0.99

    logits = jnp.log((p + 1e-10) / (1.0 - p + 1e-10)) + g
    sample = jax.nn.sigmoid(logits)
    # forward value of the straight-through estimator is just the hard sample
    o_ref[...] = (sample > threshold).astype(o_ref.dtype)


def multi_distance_channel_clustering(X, gumbel_noise, *, sigma=1.5, channel_count=None):
    """X: [B, C, T] f32, gumbel_noise: [B, C, C] f32 -> clustering mask [B, 1, C, C]."""
    threshold = 0.7 if channel_count is None else 0.7 - 0.02 * (channel_count - 8)

    XF = jnp.abs(jnp.fft.rfft(X, axis=-1)).astype(jnp.float32)    # [B, C, F]
    B, C, F = XF.shape
    Cp = _round_up(C, 128)    # lane-dense channel ("column") axis
    Fp = _round_up(F, 128)    # lane-dense frequency axis (zero pad: Gram/norms unchanged)

    XFp = jnp.zeros((B, Cp, Fp), jnp.float32).at[:, :C, :F].set(XF)
    GUMp = jnp.zeros((B, C, Cp), jnp.float32).at[:, :, :C].set(
        gumbel_noise.astype(jnp.float32))

    # ---- choose how many batch elements to fuse per grid step ----
    # Amortizes the ~0.35us per-step pipeline overhead; keeps >= 2 grid steps so both
    # v7x TensorCores get work; stays well inside v7x's smaller (64 MiB) VMEM.
    bytes_per_b = 4 * (Cp * Fp + 2 * C * Cp)          # xf + noise + out per batch elem (f32)
    vmem_budget = 24 * 1024 * 1024                    # conservative (double buffering ~2x)
    bblk = max(1, min(B, vmem_budget // (2 * bytes_per_b)))
    if B >= 2:
        bblk = min(bblk, B // 2)                      # >= 2 parallel steps (v7x megacore)
    while B % bblk:                                   # keep the grid exact
        bblk -= 1
    grid = (B // bblk,)

    kernel = partial(
        _cluster_kernel, C=C,
        inv_two_sigma_sq=1.0 / (2.0 * float(sigma) ** 2),
        threshold=float(threshold))

    out = pl.pallas_call(
        kernel,
        out_shape=jax.ShapeDtypeStruct((B, C, Cp), jnp.float32),
        grid=grid,
        in_specs=[
            pl.BlockSpec((bblk, Cp, Fp), lambda b: (b, 0, 0)),
            pl.BlockSpec((bblk, C, Cp), lambda b: (b, 0, 0)),
        ],
        out_specs=pl.BlockSpec((bblk, C, Cp), lambda b: (b, 0, 0)),
        compiler_params=pltpu.CompilerParams(
            dimension_semantics=("parallel",),
            vmem_limit_bytes=32 * 1024 * 1024),
    )(XFp, GUMp)

    return out[:, :, :C][:, None, :, :]               # [B, 1, C, C]


if __name__ == "__main__":
    # distance_type='rbf': torch defines self.gamma = nn.Parameter(torch.ones(1)) but the
    # rbf forward path only uses the sigma hyperparameter; mirror that (define, don't use).
    gamma = jnp.ones((1,), jnp.float32)  # noqa: F841  (unused, as in the torch module)

    B, C, T = 2, 8, 16                   # input_size=T=16 -> frequency_size = 9
    key = jax.random.PRNGKey(0)
    kx, kg = jax.random.split(key)
    X = jax.random.normal(kx, (B, C, T), dtype=jnp.float32)
    # Gumbel(0,1) noise (torch samples it inside forward; explicit input here).
    # TODO(synk): could be generated in-kernel via pltpu.prng_seed/prng_random_bits to drop
    # this HBM input stream entirely (matters as C grows).
    gumbel_noise = jax.random.gumbel(kg, (B, C, C), dtype=jnp.float32)

    mask = multi_distance_channel_clustering(X, gumbel_noise, sigma=1.5, channel_count=None)
    jax.block_until_ready(mask)
    assert mask.shape == (B, 1, C, C)
    assert bool(jnp.all((mask == 0.0) | (mask == 1.0)))  # hard 0/1 clustering mask
    print("KERNEL_OK")
</pallas_src>

<mosaic_0001>
module attributes {stable_mosaic.version = 11 : i64} {
  func.func @_cluster_kernel(%arg0: i32, %arg1: memref<1x128x128xf32, #tpu.memory_space<vmem>>, %arg2: memref<1x8x128xf32, #tpu.memory_space<vmem>>, %arg3: memref<1x8x128xf32, #tpu.memory_space<vmem>>) attributes {dimension_semantics = [#tpu.dimension_semantics<parallel>], iteration_bounds = array<i64: 2>, scalar_prefetch = 0 : i64, scratch_operands = 0 : i64, tpu.core_type = #tpu.core_type<tc>, window_params = [{transform_indices = @transform_0, window_bounds = array<i64: 1, 128, 128>}, {transform_indices = @transform_1, window_bounds = array<i64: 1, 8, 128>}, {transform_indices = @transform_2, window_bounds = array<i64: 1, 8, 128>}]} {
    %c0 = arith.constant 0 : index
    %c0_0 = arith.constant 0 : index
    %c0_1 = arith.constant 0 : index
    %0 = vector.load %arg1[%c0, %c0_0, %c0_1] : memref<1x128x128xf32, #tpu.memory_space<vmem>>, vector<1x128x128xf32>
    %c0_2 = arith.constant 0 : index
    %c0_3 = arith.constant 0 : index
    %c0_4 = arith.constant 0 : index
    %1 = vector.load %arg2[%c0_2, %c0_3, %c0_4] : memref<1x8x128xf32, #tpu.memory_space<vmem>>, vector<1x8x128xf32>
    %2 = vector.extract_strided_slice %0 {offsets = [0, 0, 0], sizes = [1, 8, 128], strides = [1, 1, 1]} : vector<1x128x128xf32> to vector<1x8x128xf32>
    %3 = arith.truncf %2 : vector<1x8x128xf32> to vector<1x8x128xbf16>
    %4 = arith.truncf %0 : vector<1x128x128xf32> to vector<1x128x128xbf16>
    "tpu.trace_start"() <{level = 10 : i32, message = "bcf,bdf->bcd"}> : () -> ()
    %cst = arith.constant dense<0.000000e+00> : vector<1x8x128xf32>
    %5 = tpu.matmul %3, %4, %cst {dimension_numbers = #tpu.dot_dimension_numbers<[2], [2], [1], [1], [0, 0, 0, 1, 1, 1], [0], [0]>} : vector<1x8x128xbf16>, vector<1x128x128xbf16>, vector<1x8x128xf32> -> vector<1x8x128xf32>
    "tpu.trace_stop"() : () -> ()
    %6 = arith.mulf %2, %2 : vector<1x8x128xf32>
    %cst_5 = arith.constant dense<0.000000e+00> : vector<1x8xf32>
    %7 = vector.multi_reduction <add>, %6, %cst_5 [2] : vector<1x8x128xf32> to vector<1x8xf32>
    %8 = vector.shape_cast %7 : vector<1x8xf32> to vector<1x8x1xf32>
    %9 = arith.mulf %0, %0 : vector<1x128x128xf32>
    %cst_6 = arith.constant dense<0.000000e+00> : vector<1x128xf32>
    %10 = vector.multi_reduction <add>, %9, %cst_6 [2] : vector<1x128x128xf32> to vector<1x128xf32>
    %11 = vector.shape_cast %10 : vector<1x128xf32> to vector<1x1x128xf32>
    %12 = vector.broadcast %8 : vector<1x8x1xf32> to vector<1x8x128xf32>
    %13 = vector.broadcast %11 : vector<1x1x128xf32> to vector<1x8x128xf32>
    %14 = arith.addf %12, %13 : vector<1x8x128xf32>
    %cst_7 = arith.constant 2.000000e+00 : f32
    %15 = vector.broadcast %cst_7 : f32 to vector<1x8x128xf32>
    %16 = arith.mulf %15, %5 : vector<1x8x128xf32>
    %17 = arith.subf %14, %16 : vector<1x8x128xf32>
    %cst_8 = arith.constant 0.000000e+00 : f32
    %18 = vector.broadcast %cst_8 : f32 to vector<1x8x128xf32>
    %19 = arith.maximumf %17, %18 : vector<1x8x128xf32>
    %cst_9 = arith.constant 0.000000e+00 : f32
    %20 = vector.broadcast %cst_9 : f32 to vector<1x8x128xf32>
    %21 = arith.subf %20, %19 : vector<1x8x128xf32>
    %cst_10 = arith.constant 0.222222224 : f32
    %22 = vector.broadcast %cst_10 : f32 to vector<1x8x128xf32>
    %23 = arith.mulf %21, %22 : vector<1x8x128xf32>
    %24 = math.exp %23 : vector<1x8x128xf32>
    %cst_11 = arith.constant 1.000000e+00 : f32
    %25 = vector.broadcast %cst_11 : f32 to vector<1x8x128xf32>
    %26 = arith.subf %25, %24 : vector<1x8x128xf32>
    %27 = tpu.iota {dimensions = array<i32: 0>} : vector<8x128xi32>
    %28 = tpu.iota {dimensions = array<i32: 1>} : vector<8x128xi32>
    %29 = arith.cmpi eq, %27, %28 : vector<8x128xi32>
    %c8_i32 = arith.constant 8 : i32
    %30 = vector.broadcast %c8_i32 : i32 to vector<8x128xi32>
    %31 = arith.cmpi slt, %28, %30 : vector<8x128xi32>
    %cst_12 = arith.constant dense<true> : vector<8x128xi1>
    %32 = arith.xori %29, %cst_12 : vector<8x128xi1>
    %33 = arith.andi %31, %32 : vector<8x128xi1>
    %34 = arith.extui %33 : vector<8x128xi1> to vector<8x128xi32>
    %35 = arith.sitofp %34 : vector<8x128xi32> to vector<8x128xf32>
    %36 = arith.extui %29 : vector<8x128xi1> to vector<8x128xi32>
    %37 = arith.sitofp %36 : vector<8x128xi32> to vector<8x128xf32>
    %cst_13 = arith.constant 1.000000e-10 : f32
    %38 = vector.broadcast %cst_13 : f32 to vector<1x8x128xf32>
    %39 = arith.addf %26, %38 : vector<1x8x128xf32>
    %40 = vector.shape_cast %35 : vector<8x128xf32> to vector<1x8x128xf32>
    %41 = arith.divf %40, %39 : vector<1x8x128xf32>
    %cst_14 = arith.constant dense<0xFF800000> : vector<1x8xf32>
    %42 = vector.multi_reduction <maximumf>, %41, %cst_14 [2] : vector<1x8x128xf32> to vector<1x8xf32>
    %43 = vector.shape_cast %42 : vector<1x8xf32> to vector<1x8x1xf32>
    %44 = vector.broadcast %43 : vector<1x8x1xf32> to vector<1x8x128xf32>
    %45 = arith.divf %41, %44 : vector<1x8x128xf32>
    %46 = vector.shape_cast %37 : vector<8x128xf32> to vector<1x8x128xf32>
    %47 = arith.addf %45, %46 : vector<1x8x128xf32>
    %cst_15 = arith.constant 9.900000e-01 : f32
    %48 = vector.broadcast %cst_15 : f32 to vector<1x8x128xf32>
    %49 = arith.mulf %47, %48 : vector<1x8x128xf32>
    %cst_16 = arith.constant 1.000000e-10 : f32
    %50 = vector.broadcast %cst_16 : f32 to vector<1x8x128xf32>
    %51 = arith.addf %49, %50 : vector<1x8x128xf32>
    %cst_17 = arith.constant 1.000000e+00 : f32
    %52 = vector.broadcast %cst_17 : f32 to vector<1x8x128xf32>
    %53 = arith.subf %52, %49 : vector<1x8x128xf32>
    %cst_18 = arith.constant 1.000000e-10 : f32
    %54 = vector.broadcast %cst_18 : f32 to vector<1x8x128xf32>
    %55 = arith.addf %53, %54 : vector<1x8x128xf32>
    %56 = arith.divf %51, %55 : vector<1x8x128xf32>
    %57 = math.log %56 : vector<1x8x128xf32>
    %58 = arith.addf %57, %1 : vector<1x8x128xf32>
    %59 = arith.negf %58 : vector<1x8x128xf32>
    %60 = math.exp %59 : vector<1x8x128xf32>
    %cst_19 = arith.constant 1.000000e+00 : f32
    %61 = vector.broadcast %cst_19 : f32 to vector<1x8x128xf32>
    %62 = arith.addf %61, %60 : vector<1x8x128xf32>
    %63 = arith.divf %61, %62 : vector<1x8x128xf32>
    %cst_20 = arith.constant 0.699999988 : f32
    %64 = vector.broadcast %cst_20 : f32 to vector<1x8x128xf32>
    %65 = arith.cmpf ogt, %63, %64 : vector<1x8x128xf32>
    %66 = arith.extui %65 : vector<1x8x128xi1> to vector<1x8x128xi32>
    %67 = arith.sitofp %66 : vector<1x8x128xi32> to vector<1x8x128xf32>
    %c0_21 = arith.constant 0 : index
    %c0_22 = arith.constant 0 : index
    %c0_23 = arith.constant 0 : index
    %68 = vector.load %arg3[%c0_21, %c0_22, %c0_23] : memref<1x8x128xf32, #tpu.memory_space<vmem>>, vector<1x8x128xf32>
    tpu.vector_store %arg3[%c0_21, %c0_22, %c0_23], %67 {strides = array<i32>} : memref<1x8x128xf32, #tpu.memory_space<vmem>>, vector<1x8x128xf32>,
    return
  }
  func.func @transform_0(%arg0: i32) -> (i32, i32, i32) {
    %c0_i32 = arith.constant 0 : i32
    %c0_i32_0 = arith.constant 0 : i32
    %c0_i32_1 = arith.constant 0 : i32
    return %arg0, %c0_i32, %c0_i32_0 : i32, i32, i32
  }
  func.func @transform_1(%arg0: i32) -> (i32, i32, i32) {
    %c0_i32 = arith.constant 0 : i32
    %c0_i32_0 = arith.constant 0 : i32
    %c0_i32_1 = arith.constant 0 : i32
    return %arg0, %c0_i32, %c0_i32_0 : i32, i32, i32
  }
  func.func @transform_2(%arg0: i32) -> (i32, i32, i32) {
    %c0_i32 = arith.constant 0 : i32
    %c0_i32_0 = arith.constant 0 : i32
    %c0_i32_1 = arith.constant 0 : i32
    return %arg0, %c0_i32, %c0_i32_0 : i32, i32, i32
  }
}

</mosaic_0001>

<llo_original>
// kernel: tpu_custom_call.1
$region0: #{tpu_custom_call.1}
  #allocation0 [shape = 'u32[]', space=smem, size = 0x4, offset = 0x4, fixed_abs, tag = 'smem constant byte address 0x4 - core index']
  #allocation1 [shape = 'u32[144,128]{1,0:T(1,128)}', space=vmem, size = 0x12000, scoped, tag = 'internal scratch']
  %s0 = inlined_call_operand.hbm [shape: f32[2,128,128], index: 0, kind: input, shape index: {}]
  %s1 = inlined_call_operand.hbm [shape: f32[2,8,128], index: 1, kind: input, shape index: {}]
  %s2 = inlined_call_operand.hbm [shape: f32[2,8,128], index: 2, kind: output, shape index: {}]
  %s3 = sld [smem:[#allocation0]]
  $region49: #{tpu_custom_call.1} parent=0
    _
  %s5 = ssub.s32 1, %s3
  %s6 = scalar_select 0, %s5, %s3
  $region1: #{tpu_custom_call.1} parent=0
    #allocation2 [shape = 'u8[131072]{0}', space=vmem, size = 0x20000, scoped, tag = 'input window, operand 0']
    #allocation3 [shape = 's32[2]{0}', space=sflag, size = 0x8, scoped, tag = 'scoped memory for tpu_custom_call.1']
    #allocation4 [shape = 's32[2]{0}', space=sflag, size = 0x8, scoped, tag = 'scoped memory for tpu_custom_call.1']
    #allocation5 [shape = 'u8[8192]{0}', space=vmem, size = 0x2000, scoped, tag = 'input window, operand 1']
    #allocation6 [shape = 's32[2]{0}', space=sflag, size = 0x8, scoped, tag = 'scoped memory for tpu_custom_call.1']
    #allocation7 [shape = 'u8[8192]{0}', space=vmem, size = 0x2000, scoped, tag = 'output window, operand 0']
    %7 = vsyncpa [#allocation3], 0
    %s8 = scalar_lea.sflag [#allocation3], 1
    %9 = vsyncpa %s8, 0
    %10 = vsyncpa [#allocation6], 0
    %s11 = scalar_lea.sflag [#allocation6], 1
    %12 = vsyncpa %s11, 0
    %13 = vsyncpa [#allocation4], 0
    %s14 = scalar_lea.sflag [#allocation4], 1
    %15 = vsyncpa %s14, 0
    loop: start=0, step=1, limit=4
    $region2: #{tpu_custom_call.1} parent=1 // loop_pre_header
      _
    $region3: #{tpu_custom_call.1} parent=1 // loop_header
      %s17 = sphi 0, %s21
      %p18 = scmp.ge.s32.totalorder %s17, 4
      %s27 = sphi 0, %s29
      %s30 = sphi 0, %s27
      %s31 = sphi 0, %s30
      %s47 = sphi 0, %s31
      %s53 = sphi 0, %s55
      %s56 = sphi 0, %s53
      %s57 = sphi 0, %s56
      %s73 = sphi 0, %s57
      %s79 = sphi 0, %s81
      %s82 = sphi 0, %s79
      %s83 = sphi 0, %s82
      %s99 = sphi 0, %s83
    $region4: #{tpu_custom_call.1} parent=1 // loop_header_branch
      %20 = sbr.rel (%p18) target = $region8
    $region5: #{tpu_custom_call.1} parent=1 // loop_body
      %s22 = ssub.s32 %s17, 1
      %s23 = ssub.s32 %s17, 2
      %s24 = sadd.s32 %s17, 1
      %s25 = ssub.s32 %s17, %s24
      %p26 = scmp.eq.s32.totalorder %s25, 0
      %s28 = sadd.s32 %s27, 1
      %s29 = scalar_select %p26, %s27, %s28
      %p32 = pneg %p26
      %p33 = scmp.eq.s32.totalorder %s17, 1
      %p34 = por %p32, %p33
      %p35 = scmp.ne.s32.totalorder %s27, %s30
      %p36 = scmp.eq.s32.totalorder %s17, 0
      %p37 = por %p35, %p36
      %p38 = scmp.ne.s32.totalorder %s27, %s30
      %p39 = scmp.eq.s32.totalorder %s22, 1
      %p40 = por %p38, %p39
      %p41 = scmp.ne.s32.totalorder %s30, %s31
      %p42 = scmp.eq.s32.totalorder %s22, 0
      %p43 = por %p41, %p42
      %p44 = scmp.ne.s32.totalorder %s30, %s31
      %p45 = scmp.eq.s32.totalorder %s23, 1
      %p46 = por %p44, %p45
      %p48 = scmp.ne.s32.totalorder %s31, %s47
      %p49 = scmp.eq.s32.totalorder %s23, 0
      %p50 = por %p48, %p49
      %s51 = ssub.s32 %s17, %s24
      %p52 = scmp.eq.s32.totalorder %s51, 0
      %s54 = sadd.s32 %s53, 1
      %s55 = scalar_select %p52, %s53, %s54
      %p58 = pneg %p52
      %p59 = scmp.eq.s32.totalorder %s17, 1
      %p60 = por %p58, %p59
      %p61 = scmp.ne.s32.totalorder %s53, %s56
      %p62 = scmp.eq.s32.totalorder %s17, 0
      %p63 = por %p61, %p62
      %p64 = scmp.ne.s32.totalorder %s53, %s56
      %p65 = scmp.eq.s32.totalorder %s22, 1
      %p66 = por %p64, %p65
      %p67 = scmp.ne.s32.totalorder %s56, %s57
      %p68 = scmp.eq.s32.totalorder %s22, 0
      %p69 = por %p67, %p68
      %p70 = scmp.ne.s32.totalorder %s56, %s57
      %p71 = scmp.eq.s32.totalorder %s23, 1
      %p72 = por %p70, %p71
      %p74 = scmp.ne.s32.totalorder %s57, %s73
      %p75 = scmp.eq.s32.totalorder %s23, 0
      %p76 = por %p74, %p75
      %s77 = ssub.s32 %s17, %s24
      %p78 = scmp.eq.s32.totalorder %s77, 0
      %s80 = sadd.s32 %s79, 1
      %s81 = scalar_select %p78, %s79, %s80
      %p84 = pneg %p78
      %p85 = scmp.eq.s32.totalorder %s17, 1
      %p86 = por %p84, %p85
      %p87 = scmp.ne.s32.totalorder %s79, %s82
      %p88 = scmp.eq.s32.totalorder %s17, 0
      %p89 = por %p87, %p88
      %p90 = scmp.ne.s32.totalorder %s79, %s82
      %p91 = scmp.eq.s32.totalorder %s22, 1
      %p92 = por %p90, %p91
      %p93 = scmp.ne.s32.totalorder %s82, %s83
      %p94 = scmp.eq.s32.totalorder %s22, 0
      %p95 = por %p93, %p94
      %p96 = scmp.ne.s32.totalorder %s82, %s83
      %p97 = scmp.eq.s32.totalorder %s23, 1
      %p98 = por %p96, %p97
      %p100 = scmp.ne.s32.totalorder %s83, %s99
      %p101 = scmp.eq.s32.totalorder %s23, 0
      %p102 = por %p100, %p101
      %p103 = scmp.le.s32.totalorder 1, %s17
      %p104 = scmp.lt.s32.totalorder %s17, 3
      %p105 = pnand %p103, %p104
      %p106 = pneg %p105
      // Predicated region
      $region9: #{tpu_custom_call.1} parent=5 // pred_check
        _
      $region10: #{tpu_custom_call.1} parent=5 // pred_check_branch
        %108 = sbr.rel (%p105) target = $region12
      $region11: #{tpu_custom_call.1} parent=5 // pred_region
        %s109 = ssub.s32 %s17, 1
      $region12: #{tpu_custom_call.1} parent=5 // pred_fallthru
        _
      %p110 = scmp.lt.s32.totalorder %s17, 2
      // Predicated region
      $region13: #{tpu_custom_call.1} parent=5 // pred_check
        %p111 = pneg %p110
      $region14: #{tpu_custom_call.1} parent=5 // pred_check_branch
        %113 = sbr.rel (%p111) target = $region16
      $region15: #{tpu_custom_call.1} parent=5 // pred_region
        // Predicated region
        $region17: #{tpu_custom_call.1} parent=15 // pred_check
          %p114 = pneg %p37
        $region18: #{tpu_custom_call.1} parent=15 // pred_check_branch
          %116 = sbr.rel (%p114) target = $region20
        $region19: #{tpu_custom_call.1} parent=15 // pred_region
          %s117 = sand.u32 %s27, 1
          %s118 = scalar_lea.sflag [#allocation3], %s117
          %s119 = sand.u32 %s27, 1
          %s120 = smul.addr %s119, 128
          %s121 = scalar_lea.vmem [#allocation2], %s120
          %s123 = ssub.s32 2048, 2048
          %124 = vsyncadd %s118, %s123
          %s125 = smul.addr %s17, 16
          %s126 = smul.addr %s125, 128
          %s127 = scalar_lea.hbm %s0, %s126
          %s128 = sshll.u32 %s121, 4
          %s129 = int_to_ptr.vmem [resolvable:$true] %s128
          %134 = dma.hbm_to_vmem [thread:$0]  %s127, 2048, %s129, %s118, 128, 128, 8
        $region20: #{tpu_custom_call.1} parent=15 // pred_fallthru
          _
        // Predicated region
        $region21: #{tpu_custom_call.1} parent=15 // pred_check
          %p135 = pneg %p63
        $region22: #{tpu_custom_call.1} parent=15 // pred_check_branch
          %137 = sbr.rel (%p135) target = $region24
        $region23: #{tpu_custom_call.1} parent=15 // pred_region
          %s138 = sand.u32 %s53, 1
          %s139 = scalar_lea.sflag [#allocation6], %s138
          %s140 = sand.u32 %s53, 1
          %s141 = smul.addr %s140, 8
          %s142 = scalar_lea.vmem [#allocation5], %s141
          %s144 = ssub.s32 128, 128
          %145 = vsyncadd %s139, %s144
          %s146 = smul.addr %s17, 128
          %s147 = scalar_lea.hbm %s1, %s146
          %s149 = sshll.u32 %s142, 4
          %s150 = int_to_ptr.vmem [resolvable:$true] %s149
          %152 = dma.hbm_to_vmem [thread:$0]  %s147, 128, %s150, %s139
        $region24: #{tpu_custom_call.1} parent=15 // pred_fallthru
          _
      $region16: #{tpu_custom_call.1} parent=5 // pred_fallthru
        _
      %p153 = scmp.le.s32.totalorder 1, %s17
      %p154 = scmp.lt.s32.totalorder %s17, 3
      %p155 = pnand %p153, %p154
      %p156 = pneg %p155
      // Predicated region
      $region25: #{tpu_custom_call.1} parent=5 // pred_check
        _
      $region26: #{tpu_custom_call.1} parent=5 // pred_check_branch
        %158 = sbr.rel (%p155) target = $region28
      $region27: #{tpu_custom_call.1} parent=5 // pred_region
        %s159 = ssub.s32 %s17, 1
        %s160 = sand.u32 %s30, 1
        %s161 = scalar_lea.sflag [#allocation3], %s160
        %s162 = sand.u32 %s30, 1
        %s163 = smul.addr %s162, 128
        %s164 = scalar_lea.vmem [#allocation2], %s163
        // Predicated region
        $region29: #{tpu_custom_call.1} parent=27 // pred_check
          %p165 = pneg %p43
        $region30: #{tpu_custom_call.1} parent=27 // pred_check_branch
          %167 = sbr.rel (%p165) target = $region32
        $region31: #{tpu_custom_call.1} parent=27 // pred_region
          %168 = dma.done %s161, 2048
        $region32: #{tpu_custom_call.1} parent=27 // pred_fallthru
          _
        %s169 = sand.u32 %s56, 1
        %s170 = scalar_lea.sflag [#allocation6], %s169
        %s171 = sand.u32 %s56, 1
        %s172 = smul.addr %s171, 8
        %s173 = scalar_lea.vmem [#allocation5], %s172
        // Predicated region
        $region33: #{tpu_custom_call.1} parent=27 // pred_check
          %p174 = pneg %p69
        $region34: #{tpu_custom_call.1} parent=27 // pred_check_branch
          %176 = sbr.rel (%p174) target = $region36
        $region35: #{tpu_custom_call.1} parent=27 // pred_region
          %177 = dma.done %s170, 128
        $region36: #{tpu_custom_call.1} parent=27 // pred_fallthru
          _
        %s178 = sand.u32 %s30, 1
        %s179 = scalar_lea.sflag [#allocation3], %s178
        %s180 = sand.u32 %s30, 1
        %s181 = smul.addr %s180, 128
        %s182 = scalar_lea.vmem [#allocation2], %s181
        %p183 = pneg %p43
        %p184 = pneg %p40
        %s185 = sand.u32 %s56, 1
        %s186 = scalar_lea.sflag [#allocation6], %s185
        %s187 = sand.u32 %s56, 1
        %s188 = smul.addr %s187, 8
        %s189 = scalar_lea.vmem [#allocation5], %s188
        %p190 = pneg %p69
        %p191 = pneg %p66
        %p192 = pneg %p95
        %p193 = pneg %p92
        %s194 = sand.u32 %s82, 1
        %s195 = scalar_lea.sflag [#allocation4], %s194
        %s196 = sand.u32 %s82, 1
        %s197 = smul.addr %s196, 8
        %s198 = scalar_lea.vmem [#allocation7], %s197
        %v200 = vld [vmem:[%s164] sm:$0xff]
        %v201 = vld [vmem:[%s164 + $0x8] sm:$0xff]
        %v202 = vld [vmem:[%s164 + $0x10] sm:$0xff]
        %v203 = vld [vmem:[%s164 + $0x18] sm:$0xff]
        %v204 = vld [vmem:[%s164 + $0x20] sm:$0xff]
        %v205 = vld [vmem:[%s164 + $0x28] sm:$0xff]
        %v206 = vld [vmem:[%s164 + $0x30] sm:$0xff]
        %v207 = vld [vmem:[%s164 + $0x38] sm:$0xff]
        %v208 = vld [vmem:[%s164 + $0x40] sm:$0xff]
        %v209 = vld [vmem:[%s164 + $0x48] sm:$0xff]
        %v210 = vld [vmem:[%s164 + $0x50] sm:$0xff]
        %v211 = vld [vmem:[%s164 + $0x58] sm:$0xff]
        %v212 = vld [vmem:[%s164 + $0x60] sm:$0xff]
        %v213 = vld [vmem:[%s164 + $0x68] sm:$0xff]
        %v214 = vld [vmem:[%s164 + $0x70] sm:$0xff]
        %v215 = vld [vmem:[%s164 + $0x78] sm:$0xff]
        %v216 = vld [vmem:[%s173] sm:$0xff]
        %v217 = vpack.c.bf16 %v200, %v200
        %v218 = vpack.c.bf16 %v201, %v200
        %v219 = vpack.c.bf16 %v203, %v202
        %v220 = vpack.c.bf16 %v205, %v204
        %v221 = vpack.c.bf16 %v207, %v206
        %v222 = vpack.c.bf16 %v209, %v208
        %v223 = vpack.c.bf16 %v211, %v210
        %v224 = vpack.c.bf16 %v213, %v212
        %v225 = vpack.c.bf16 %v215, %v214
        %226 = vmatprep.subr.bf16.mxu0 0
        %227 = vmatpush1.bf16.xpose.msra.mxu0 %v225
        %228 = vmatprep.subr.bf16.mxu0 0
        %229 = vmatpush1.bf16.xpose.msra.mxu0 %v224
        %230 = vmatprep.subr.bf16.mxu0 0
        %231 = vmatpush1.bf16.xpose.msra.mxu0 %v223
        %232 = vmatprep.subr.bf16.mxu0 0
        %233 = vmatpush1.bf16.xpose.msra.mxu0 %v222
        %234 = vmatprep.subr.bf16.mxu0 0
        %235 = vmatpush1.bf16.xpose.msra.mxu0 %v221
        %236 = vmatprep.subr.bf16.mxu0 0
        %237 = vmatpush1.bf16.xpose.msra.mxu0 %v220
        %238 = vmatprep.subr.bf16.mxu0 0
        %239 = vmatpush1.bf16.xpose.msra.mxu0 %v219
        %240 = vmatprep.subr.bf16.mxu0 0
        %241 = vmatpush1.bf16.xpose.msra.mxu0 %v218
        %242 = vmatprep.subr.bf16.mxu0 0
        %243 = vmatpush2.bf16.xpose.msra.mxu0 0
        %244 = vmatprep.subr.bf16.mxu0 0
        %245 = vmatpush2.bf16.xpose.msra.mxu0 0
        %246 = vmatprep.subr.bf16.mxu0 0
        %247 = vmatpush2.bf16.xpose.msra.mxu0 0
        %248 = vmatprep.subr.bf16.mxu0 0
        %249 = vmatpush2.bf16.xpose.msra.mxu0 0
        %250 = vmatprep.subr.bf16.mxu0 0
        %251 = vmatpush2.bf16.xpose.msra.mxu0 0
        %252 = vmatprep.subr.bf16.mxu0 0
        %253 = vmatpush2.bf16.xpose.msra.mxu0 0
        %254 = vmatprep.subr.bf16.mxu0 0
        %255 = vmatpush2.bf16.xpose.msra.mxu0 0
        %256 = vmatprep.subr.bf16.mxu0 0
        %257 = vmatpush2.bf16.xpose.msra.mxu0 0
        %258 = vmatprep.mubr.bf16.mxu0 0
        %259 = vmatmul.mubr.bf16.gmra.mxu0 %v217
        %v260 = vpop.f32.mrf.mxu0
        %v261 = vadd.f32 0.0, %v260
        %v262 = vpop.f32.mrf.mxu0
        %v263 = vpop.f32.mrf.mxu0
        %v264 = vpop.f32.mrf.mxu0
        %265 = vdwg.mxu0
        %v266 = vmul.f32 %v200, %v200
        %267 = vadd.xlane.f32.xlu0 %v266
        %v268 = vpop.xlane.xlu0 %267
        %v269 = vmul.f32 %v201, %v201
        %v270 = vmul.f32 %v202, %v202
        %v271 = vmul.f32 %v203, %v203
        %v272 = vmul.f32 %v204, %v204
        %v273 = vmul.f32 %v205, %v205
        %v274 = vmul.f32 %v206, %v206
        %v275 = vmul.f32 %v207, %v207
        %v276 = vmul.f32 %v208, %v208
        %v277 = vmul.f32 %v209, %v209
        %v278 = vmul.f32 %v210, %v210
        %v279 = vmul.f32 %v211, %v211
        %v280 = vmul.f32 %v212, %v212
        %v281 = vmul.f32 %v213, %v213
        %v282 = vmul.f32 %v214, %v214
        %v283 = vmul.f32 %v215, %v215
        %284 = vadd.xlane.f32.xlu0 %v269
        %v285 = vpop.xlane.xlu0 %284
        %286 = vadd.xlane.f32.xlu0 %v270
        %v287 = vpop.xlane.xlu0 %286
        %288 = vadd.xlane.f32.xlu0 %v271
        %v289 = vpop.xlane.xlu0 %288
        %290 = vadd.xlane.f32.xlu0 %v272
        %v291 = vpop.xlane.xlu0 %290
        %292 = vadd.xlane.f32.xlu0 %v273
        %v293 = vpop.xlane.xlu0 %292
        %294 = vadd.xlane.f32.xlu0 %v274
        %v295 = vpop.xlane.xlu0 %294
        %296 = vadd.xlane.f32.xlu0 %v275
        %v297 = vpop.xlane.xlu0 %296
        %298 = vadd.xlane.f32.xlu0 %v276
        %v299 = vpop.xlane.xlu0 %298
        %300 = vadd.xlane.f32.xlu0 %v277
        %v301 = vpop.xlane.xlu0 %300
        %302 = vadd.xlane.f32.xlu0 %v278
        %v303 = vpop.xlane.xlu0 %302
        %304 = vadd.xlane.f32.xlu0 %v279
        %v305 = vpop.xlane.xlu0 %304
        %306 = vadd.xlane.f32.xlu0 %v280
        %v307 = vpop.xlane.xlu0 %306
        %308 = vadd.xlane.f32.xlu0 %v281
        %v309 = vpop.xlane.xlu0 %308
        %310 = vadd.xlane.f32.xlu0 %v282
        %v311 = vpop.xlane.xlu0 %310
        %312 = vadd.xlane.f32.xlu0 %v283
        %v313 = vpop.xlane.xlu0 %312
        %v330 = vlaneseq
        %v331 = vand.u32 %v330, 127
        %v332 = vlaneseq
        %v333 = vshrl.u32 %v332, 7
        %v334 = vsub.s32 %v331, %v333
        %v335 = vrot.slane %v268, %v334
        %v336 = vadd.s32 %v331, 4294967288
        %v337 = vlaneseq
        %v338 = vshrl.u32 %v337, 7
        %v339 = vsub.s32 %v336, %v338
        %v340 = vrot.slane %v285, %v339
        %vm341 = vcmask 130112
        %v342 = vsel %vm341, %v340, %v335
        %v343 = vadd.s32 %v331, 4294967280
        %v344 = vlaneseq
        %v345 = vshrl.u32 %v344, 7
        %v346 = vsub.s32 %v343, %v345
        %v347 = vrot.slane %v287, %v346
        %vm348 = vcmask 195712
        %v349 = vsel %vm348, %v347, %v342
        %v350 = vadd.s32 %v331, 4294967272
        %v351 = vlaneseq
        %v352 = vshrl.u32 %v351, 7
        %v353 = vsub.s32 %v350, %v352
        %v354 = vrot.slane %v289, %v353
        %vm355 = vcmask 261312
        %v356 = vsel %vm355, %v354, %v349
        %v357 = vadd.s32 %v331, 4294967264
        %v358 = vlaneseq
        %v359 = vshrl.u32 %v358, 7
        %v360 = vsub.s32 %v357, %v359
        %v361 = vrot.slane %v291, %v360
        %vm362 = vcmask 326912
        %v363 = vsel %vm362, %v361, %v356
        %v364 = vadd.s32 %v331, 4294967256
        %v365 = vlaneseq
        %v366 = vshrl.u32 %v365, 7
        %v367 = vsub.s32 %v364, %v366
        %v368 = vrot.slane %v293, %v367
        %vm369 = vcmask 392512
        %v370 = vsel %vm369, %v368, %v363
        %v371 = vadd.s32 %v331, 4294967248
        %v372 = vlaneseq
        %v373 = vshrl.u32 %v372, 7
        %v374 = vsub.s32 %v371, %v373
        %v375 = vrot.slane %v295, %v374
        %vm376 = vcmask 458112
        %v377 = vsel %vm376, %v375, %v370
        %v378 = vadd.s32 %v331, 4294967240
        %v379 = vlaneseq
        %v380 = vshrl.u32 %v379, 7
        %v381 = vsub.s32 %v378, %v380
        %v382 = vrot.slane %v297, %v381
        %vm383 = vcmask 523712
        %v384 = vsel %vm383, %v382, %v377
        %v385 = vadd.s32 %v331, 4294967232
        %v386 = vlaneseq
        %v387 = vshrl.u32 %v386, 7
        %v388 = vsub.s32 %v385, %v387
        %v389 = vrot.slane %v299, %v388
        %vm390 = vcmask 589312
        %v391 = vsel %vm390, %v389, %v384
        %v392 = vadd.s32 %v331, 4294967224
        %v393 = vlaneseq
        %v394 = vshrl.u32 %v393, 7
        %v395 = vsub.s32 %v392, %v394
        %v396 = vrot.slane %v301, %v395
        %vm397 = vcmask 654912
        %v398 = vsel %vm397, %v396, %v391
        %v399 = vadd.s32 %v331, 4294967216
        %v400 = vlaneseq
        %v401 = vshrl.u32 %v400, 7
        %v402 = vsub.s32 %v399, %v401
        %v403 = vrot.slane %v303, %v402
        %vm404 = vcmask 720512
        %v405 = vsel %vm404, %v403, %v398
        %v406 = vadd.s32 %v331, 4294967208
        %v407 = vlaneseq
        %v408 = vshrl.u32 %v407, 7
        %v409 = vsub.s32 %v406, %v408
        %v410 = vrot.slane %v305, %v409
        %vm411 = vcmask 786112
        %v412 = vsel %vm411, %v410, %v405
        %v413 = vadd.s32 %v331, 4294967200
        %v414 = vlaneseq
        %v415 = vshrl.u32 %v414, 7
        %v416 = vsub.s32 %v413, %v415
        %v417 = vrot.slane %v307, %v416
        %vm418 = vcmask 851712
        %v419 = vsel %vm418, %v417, %v412
        %v420 = vadd.s32 %v331, 4294967192
        %v421 = vlaneseq
        %v422 = vshrl.u32 %v421, 7
        %v423 = vsub.s32 %v420, %v422
        %v424 = vrot.slane %v309, %v423
        %vm425 = vcmask 917312
        %v426 = vsel %vm425, %v424, %v419
        %v427 = vadd.s32 %v331, 4294967184
        %v428 = vlaneseq
        %v429 = vshrl.u32 %v428, 7
        %v430 = vsub.s32 %v427, %v429
        %v431 = vrot.slane %v311, %v430
        %vm432 = vcmask 982912
        %v433 = vsel %vm432, %v431, %v426
        %v434 = vadd.s32 %v331, 4294967176
        %v435 = vlaneseq
        %v436 = vshrl.u32 %v435, 7
        %v437 = vsub.s32 %v434, %v436
        %v438 = vrot.slane %v313, %v437
        %vm439 = vcmask 1048512
        %v440 = vsel %vm439, %v438, %v433
        %vm441 = vcmask 1042434
        %v442 = vsel %vm441, %v440, %v440
        %vm443 = vcmask 1043459
        %v444 = vsel %vm443, %v440, %v442
        %vm445 = vcmask 1044484
        %v446 = vsel %vm445, %v440, %v444
        %vm447 = vcmask 1045509
        %v448 = vsel %vm447, %v440, %v446
        %vm449 = vcmask 1046534
        %v450 = vsel %vm449, %v440, %v448
        %vm451 = vcmask 1047559
        %v452 = vsel %vm451, %v440, %v450
        %v454 = vadd.f32 %v268, %v452
        %v455 = vmul.f32 %v261, 2.0
        %v456 = vsub.f32 %v454, %v455
        %v457 = vmax.f32 %v456, 0.0
        %v458 = vsub.f32 0.0, %v457
        %v459 = vmul.f32 %v458, 0.22222222
        %v460 = vmul.f32 %v459, 1.442695
        %v461 = vpow.pop %v460
        %v462 = vsub.f32 1.0, %v461
        %v463 = vlaneseq
        %v464 = vshrl.u32 %v463, 7
        %vm465 = vcmp.eq.s32.totalorder %v464, %v331
        %vm466 = vcmp.lt.s32.totalorder %v331, 8
        %vm467 = vmxor %vm465, 1
        %vm468 = vmand %vm466, %vm467
        %v469 = vsel %vm468, 1, 0
        %v470 = vcvt.s32.f32 %v469
        %v471 = vsel %vm465, 1, 0
        %v472 = vcvt.s32.f32 %v471
        %v473 = vadd.f32 %v462, 1e-10
        %v474 = vrcp.pop %v473
        %v475 = vmul.f32 %v470, %v474
        %476 = vmax.xlane.f32.xlu0 %v475
        %v477 = vpop.xlane.xlu0 %476
        %v478 = vrcp.pop %v477
        %v479 = vmul.f32 %v475, %v478
        %v480 = vadd.f32 %v479, %v472
        %v481 = vmul.f32 %v480, 0.99
        %v482 = vadd.f32 %v481, 1e-10
        %v483 = vsub.f32 1.0, %v481
        %v484 = vadd.f32 %v483, 1e-10
        %v485 = vrcp.pop %v484
        %v486 = vmul.f32 %v482, %v485
        %v487 = vlog2.pop %v486
        %v488 = vmul.f32 %v487, 0.6931472
        %v489 = vadd.f32 %v488, %v216
        %v490 = vxor.u32 %v489, 2147483648
        %v491 = vmul.f32 %v490, 1.442695
        %v492 = vpow.pop %v491
        %v493 = vadd.f32 %v492, 1.0
        %v494 = vrcp.pop %v493
        %v495 = vmul.f32 1.0, %v494
        %vm496 = vcmp.gt.f32.partialorder %v495, 0.7
        %v497 = vsel %vm496, 1, 0
        %v498 = vcvt.s32.f32 %v497
        %499 = vst [vmem:[%s198] sm:$0xff] %v498
        %s500 = sand.u32 %s82, 1
        %s501 = scalar_lea.sflag [#allocation4], %s500
        %s502 = sand.u32 %s82, 1
        %s503 = smul.addr %s502, 8
        %s504 = scalar_lea.vmem [#allocation7], %s503
        // Predicated region
        $region37: #{tpu_custom_call.1} parent=27 // pred_check
          %p505 = pneg %p92
        $region38: #{tpu_custom_call.1} parent=27 // pred_check_branch
          %507 = sbr.rel (%p505) target = $region40
        $region39: #{tpu_custom_call.1} parent=27 // pred_region
          %s509 = ssub.s32 128, 128
          %510 = vsyncadd %s501, %s509
          %s511 = smul.addr %s22, 128
          %s512 = scalar_lea.hbm %s2, %s511
          %s514 = sshll.u32 %s504, 4
          %s515 = int_to_ptr.vmem [resolvable:$true] %s514
          %517 = dma.vmem_to_hbm [thread:$0]  %s515, 128, %s512, %s501
        $region40: #{tpu_custom_call.1} parent=27 // pred_fallthru
          _
      $region28: #{tpu_custom_call.1} parent=5 // pred_fallthru
        _
      %p518 = scmp.le.s32.totalorder 2, %s17
      // Predicated region
      $region41: #{tpu_custom_call.1} parent=5 // pred_check
        %p519 = pneg %p518
      $region42: #{tpu_custom_call.1} parent=5 // pred_check_branch
        %521 = sbr.rel (%p519) target = $region44
      $region43: #{tpu_custom_call.1} parent=5 // pred_region
        %s522 = ssub.s32 %s17, 2
        // Predicated region
        $region45: #{tpu_custom_call.1} parent=43 // pred_check
          %p523 = pneg %p98
        $region46: #{tpu_custom_call.1} parent=43 // pred_check_branch
          %525 = sbr.rel (%p523) target = $region48
        $region47: #{tpu_custom_call.1} parent=43 // pred_region
          %s526 = sand.u32 %s83, 1
          %s527 = scalar_lea.sflag [#allocation4], %s526
          %s528 = sand.u32 %s83, 1
          %s529 = smul.addr %s528, 8
          %s530 = scalar_lea.vmem [#allocation7], %s529
          %531 = dma.done %s527, 128
        $region48: #{tpu_custom_call.1} parent=43 // pred_fallthru
          _
      $region44: #{tpu_custom_call.1} parent=5 // pred_fallthru
        _
    $region6: #{tpu_custom_call.1} parent=1 // loop_footer
      %s21 = sadd.s32 1, %s17
    $region7: #{tpu_custom_call.1} parent=1 // loop_footer_branch
      %16 = sbr.rel target = $region3
    $region8: #{tpu_custom_call.1} parent=1 // loop_exit
      _
    %532 = vsyncpa [#allocation3], 1
    %s533 = scalar_lea.sflag [#allocation3], 1
    %534 = vsyncpa %s533, 1
    %535 = vsyncpa [#allocation6], 1
    %s536 = scalar_lea.sflag [#allocation6], 1
    %537 = vsyncpa %s536, 1
    %538 = vsyncpa [#allocation4], 1
    %s539 = scalar_lea.sflag [#allocation4], 1
    %540 = vsyncpa %s539, 1

</llo_original>
